<compile_context>
chip_gen: v7x
topology: tpu7x:2x2x1
jax: 0.10.0
libtpu: 0.0.40
codegen_flags: <defaults>
</compile_context>

<pallas_src>
import functools

import jax
import jax.numpy as jnp
import numpy as np
from jax.experimental import pallas as pl
from jax.experimental.pallas import tpu as pltpu

LANES = 128


def _attn_gate_kernel(wg_ref, wx_ref, ba_ref, wp_ref, bp_ref,
                      g_ref, x_ref, out_ref):
    """One (channels, tile_rows, 128) tile.

    g_ref:  (F_g, TR, 128)   x_ref / out_ref: (F_l, TR, 128)   -- VMEM
    wg_ref: (F_g, F_int), wx_ref: (F_l, F_int), ba_ref: (F_int,),
    wp_ref: (F_int,), bp_ref: (1,)                              -- SMEM f32
    """
    f_g = g_ref.shape[0]
    f_l = x_ref.shape[0]
    f_int = ba_ref.shape[0]
    tr, lanes = x_ref.shape[1], x_ref.shape[2]

    # Upcast once; all elementwise math stays f32 (v5e has no bf16 VPU/EUP).
    g = g_ref[...].astype(jnp.float32)          # (F_g, TR, 128)
    x = x_ref[...].astype(jnp.float32)          # (F_l, TR, 128)

    # psi pre-activation accumulated on full (TR, 128) vreg tiles so the
    # ~60 element-ops per pixel run with full sublane occupancy.
    psi = jnp.full((tr, lanes), bp_ref[0], dtype=jnp.float32)
    # Channel counts are tiny (4/4/2): unrolled VPU FMAs with SMEM scalar
    # weights beat the MXU here.  For UNet-scale channels (>=128) switch these
    # loops to jnp.dot on (F_int, C) x (C, TR*128) tiles instead.
    for j in range(f_int):
        acc = jnp.full((tr, lanes), ba_ref[j], dtype=jnp.float32)
        for i in range(f_g):
            acc = acc + wg_ref[i, j] * g[i]                  # (TR, 128) FMA
        for i in range(f_l):
            acc = acc + wx_ref[i, j] * x[i]
        psi = psi + wp_ref[j] * jnp.maximum(acc, 0.0)        # ReLU

    gate = jax.nn.sigmoid(psi)                               # (TR, 128) -> EUP
    # Broadcast the gate over the F_l channels; lane-dense full-block store.
    out_ref[...] = (x * gate[None, :, :]).astype(out_ref.dtype)


def _fold_bn(w, b, gamma, beta, mean, var, eps=1e-5):
    """Fold eval-mode BatchNorm into a 1x1 conv expressed as (Cin, Cout) matmul."""
    scale = gamma / jnp.sqrt(var + eps)               # (Cout,)
    w_eff = w * scale[None, :]                        # (Cin, Cout)
    b_eff = (b - mean) * scale + beta                 # (Cout,)
    return w_eff, b_eff


@functools.partial(jax.jit, static_argnames=("tile_rows", "out_dtype"))
def attention_gate(g, x, params, tile_rows=None, out_dtype=None):
    """g: (N, F_g, H, W), x: (N, F_l, H, W) in NCHW. Returns (N, F_l, H, W)."""
    N, F_g, H, W = g.shape
    _, F_l, _, _ = x.shape
    HW = H * W
    out_dtype = jnp.dtype(x.dtype if out_dtype is None else out_dtype)

    wg, bg = _fold_bn(params["wg"], params["bg"], params["bn_g_gamma"],
                      params["bn_g_beta"], params["bn_g_mean"], params["bn_g_var"])
    wx, bx = _fold_bn(params["wx"], params["bx"], params["bn_x_gamma"],
                      params["bn_x_beta"], params["bn_x_mean"], params["bn_x_var"])
    wp, bp = _fold_bn(params["wpsi"], params["bpsi"], params["bn_p_gamma"],
                      params["bn_p_beta"], params["bn_p_mean"], params["bn_p_var"])
    F_int = wg.shape[1]

    wg = wg.astype(jnp.float32)                   # (F_g, F_int)
    wx = wx.astype(jnp.float32)                   # (F_l, F_int)
    ba = (bg + bx).astype(jnp.float32)            # (F_int,) combined bias
    wp_vec = wp.reshape(F_int).astype(jnp.float32)
    bp_vec = bp.reshape(1).astype(jnp.float32)

    # Spatial axis -> (rows, 128): a pure reshape (no transpose, no extra HBM
    # pass) whenever H*W is a multiple of 128 -- the common UNet case.
    R = pl.cdiv(HW, LANES)
    HW_pad = R * LANES
    g3 = g.reshape(N, F_g, HW)                    # native dtype, no cast here
    x3 = x.reshape(N, F_l, HW)
    if HW_pad != HW:
        # Uncommon path (odd spatial sizes): one extra pass over the inputs.
        g3 = jnp.pad(g3, ((0, 0), (0, 0), (0, HW_pad - HW)))
        x3 = jnp.pad(x3, ((0, 0), (0, 0), (0, HW_pad - HW)))
    g4 = g3.reshape(N, F_g, R, LANES)
    x4 = x3.reshape(N, F_l, R, LANES)

    in_bytes = jnp.dtype(g.dtype).itemsize
    out_bytes = out_dtype.itemsize

    # Row-tile selection:
    #  * default 256 rows = 32K spatial elements / grid step (large DMAs),
    #  * capped so the double-buffered working set stays <= ~12 MiB
    #    (safe under default scoped-VMEM limits on v5e/v6e and v7x's 64 MiB),
    #  * multiple of 8 (full sublanes) or exactly R,
    #  * when N == 1, split the row axis so v7x's two TCs both get grid steps.
    if tile_rows is None:
        tile_rows = 256
    bytes_per_row = 2 * ((F_g + F_l) * in_bytes + F_l * out_bytes) * LANES
    max_rows = max(8, (12 * 1024 * 1024) // bytes_per_row)
    tile_rows = min(tile_rows, max_rows)
    if N == 1:
        tile_rows = min(tile_rows, max(8, -(-R // 2)))       # ceil(R / 2)
    if tile_rows >= R:
        tile_rows = R                                        # full-extent block
    else:
        tile_rows = max(8, (tile_rows // 8) * 8)
    num_rt = pl.cdiv(R, tile_rows)   # ragged last block: its stores are masked

    # Advisory cost for XLA scheduling around this memory-bound custom call.
    flops = int(N * HW * (F_int * (2 * (F_g + F_l) + 3) + F_l + 1))
    bytes_accessed = int(N * HW * ((F_g + F_l) * in_bytes + F_l * out_bytes))
    cost = pl.CostEstimate(flops=flops, transcendentals=int(N * HW),
                           bytes_accessed=bytes_accessed)

    smem = pl.BlockSpec(memory_space=pltpu.MemorySpace.SMEM)

    def tile_spec(c):
        # (batch squeezed, all channels, row tile, full 128 lanes)
        return pl.BlockSpec((None, c, tile_rows, LANES),
                            lambda n, r: (n, 0, r, 0))

    out4 = pl.pallas_call(
        _attn_gate_kernel,
        out_shape=jax.ShapeDtypeStruct((N, F_l, R, LANES), out_dtype),
        grid=(N, num_rt),
        in_specs=[smem, smem, smem, smem, smem,     # wg, wx, ba, wp, bp (SMEM)
                  tile_spec(F_g),                   # g tile  (F_g, TR, 128)
                  tile_spec(F_l)],                  # x tile  (F_l, TR, 128)
        out_specs=tile_spec(F_l),
        compiler_params=pltpu.CompilerParams(
            dimension_semantics=("parallel", "parallel")),
        cost_estimate=cost,
    )(wg, wx, ba, wp_vec, bp_vec, g4, x4)

    out = out4.reshape(N, F_l, HW_pad)
    if HW_pad != HW:
        out = out[:, :, :HW]
    return out.reshape(N, F_l, H, W)


def _reference(g, x, params, eps=1e-5):
    """Plain-JAX reference of the PyTorch forward (BN in eval mode)."""
    def conv1x1(inp, w, b):          # inp NCHW, w (Cin, Cout)
        return jnp.einsum("nchw,co->nohw", inp, w) + b[None, :, None, None]

    def bn(inp, gamma, beta, mean, var):
        s = gamma / jnp.sqrt(var + eps)
        return inp * s[None, :, None, None] + (beta - mean * s)[None, :, None, None]

    g1 = bn(conv1x1(g, params["wg"], params["bg"]), params["bn_g_gamma"],
            params["bn_g_beta"], params["bn_g_mean"], params["bn_g_var"])
    x1 = bn(conv1x1(x, params["wx"], params["bx"]), params["bn_x_gamma"],
            params["bn_x_beta"], params["bn_x_mean"], params["bn_x_var"])
    a = jnp.maximum(g1 + x1, 0.0)
    psi = bn(conv1x1(a, params["wpsi"], params["bpsi"]), params["bn_p_gamma"],
             params["bn_p_beta"], params["bn_p_mean"], params["bn_p_var"])
    psi = jax.nn.sigmoid(psi)
    return x * psi


def _make_params(key, F_g, F_l, F_int):
    ks = jax.random.split(key, 8)
    return {
        # 1x1 conv weights stored as (Cin, Cout) matmul weights.
        "wg": jax.random.normal(ks[0], (F_g, F_int), jnp.float32) * 0.5,
        "bg": jax.random.normal(ks[1], (F_int,), jnp.float32) * 0.1,
        "wx": jax.random.normal(ks[2], (F_l, F_int), jnp.float32) * 0.5,
        "bx": jax.random.normal(ks[3], (F_int,), jnp.float32) * 0.1,
        "wpsi": jax.random.normal(ks[4], (F_int, 1), jnp.float32) * 0.5,
        "bpsi": jax.random.normal(ks[5], (1,), jnp.float32) * 0.1,
        # BatchNorm (eval mode) params / running stats.
        # TODO(synk): training-mode BN (batch statistics + running-stat update)
        # is not implemented; eval-mode BN is folded into the 1x1 convs.
        "bn_g_gamma": jnp.linspace(0.9, 1.1, F_int, dtype=jnp.float32),
        "bn_g_beta": jnp.linspace(-0.1, 0.1, F_int, dtype=jnp.float32),
        "bn_g_mean": jnp.linspace(-0.2, 0.2, F_int, dtype=jnp.float32),
        "bn_g_var": jnp.linspace(0.8, 1.2, F_int, dtype=jnp.float32),
        "bn_x_gamma": jnp.linspace(1.1, 0.9, F_int, dtype=jnp.float32),
        "bn_x_beta": jnp.linspace(0.1, -0.1, F_int, dtype=jnp.float32),
        "bn_x_mean": jnp.linspace(0.2, -0.2, F_int, dtype=jnp.float32),
        "bn_x_var": jnp.linspace(1.2, 0.8, F_int, dtype=jnp.float32),
        "bn_p_gamma": jnp.full((1,), 1.05, jnp.float32),
        "bn_p_beta": jnp.full((1,), -0.05, jnp.float32),
        "bn_p_mean": jnp.full((1,), 0.1, jnp.float32),
        "bn_p_var": jnp.full((1,), 0.9, jnp.float32),
    }


if __name__ == "__main__":
    # Small shapes consistent with the module: batch=2, F_g=F_l=4, F_int=2, 16x16.
    N, F_g, F_l, F_int, H, W = 2, 4, 4, 2, 16, 16

    key = jax.random.PRNGKey(0)
    kg, kx, kp = jax.random.split(key, 3)
    g = jax.random.normal(kg, (N, F_g, H, W), jnp.float32)
    x = jax.random.normal(kx, (N, F_l, H, W), jnp.float32)
    params = _make_params(kp, F_g, F_l, F_int)

    ref = _reference(g, x, params)

    # f32 path: matches the eval-mode PyTorch forward to tight tolerance.
    out = jax.block_until_ready(attention_gate(g, x, params))
    np.testing.assert_allclose(np.asarray(out), np.asarray(ref),
                               rtol=1e-5, atol=1e-5)

    # bf16-I/O path: inputs arrive already in bf16 from the producer (no
    # wrapper-side convert pass), compute stays f32 in-kernel, output is bf16.
    g_bf = g.astype(jnp.bfloat16)
    x_bf = x.astype(jnp.bfloat16)
    out_bf = jax.block_until_ready(
        attention_gate(g_bf, x_bf, params, out_dtype=jnp.bfloat16))
    np.testing.assert_allclose(np.asarray(out_bf.astype(jnp.float32)),
                               np.asarray(ref), rtol=5e-2, atol=5e-2)

    print("KERNEL_OK")
</pallas_src>

<mosaic_0001>
module attributes {stable_mosaic.version = 11 : i64} {
  func.func @_attn_gate_kernel(%arg0: i32, %arg1: i32, %arg2: memref<4x2xf32, #tpu.memory_space<smem>>, %arg3: memref<4x2xf32, #tpu.memory_space<smem>>, %arg4: memref<2xf32, #tpu.memory_space<smem>>, %arg5: memref<2xf32, #tpu.memory_space<smem>>, %arg6: memref<1xf32, #tpu.memory_space<smem>>, %arg7: memref<1x4x2x128xf32, #tpu.memory_space<vmem>>, %arg8: memref<1x4x2x128xf32, #tpu.memory_space<vmem>>, %arg9: memref<1x4x2x128xf32, #tpu.memory_space<vmem>>) attributes {dimension_semantics = [#tpu.dimension_semantics<parallel>, #tpu.dimension_semantics<parallel>], iteration_bounds = array<i64: 2, 1>, scalar_prefetch = 0 : i64, scratch_operands = 0 : i64, tpu.core_type = #tpu.core_type<tc>, window_params = [{transform_indices = @transform_0, window_bounds = array<i64: 4, 2>}, {transform_indices = @transform_1, window_bounds = array<i64: 4, 2>}, {transform_indices = @transform_2, window_bounds = array<i64: 2>}, {transform_indices = @transform_3, window_bounds = array<i64: 2>}, {transform_indices = @transform_4, window_bounds = array<i64: 1>}, {transform_indices = @transform_5, window_bounds = array<i64: 1, 4, 2, 128>}, {transform_indices = @transform_6, window_bounds = array<i64: 1, 4, 2, 128>}, {transform_indices = @transform_7, window_bounds = array<i64: 1, 4, 2, 128>}]} {
    %c0 = arith.constant 0 : index
    %c0_0 = arith.constant 0 : index
    %c0_1 = arith.constant 0 : index
    %c0_2 = arith.constant 0 : index
    %0 = vector.load %arg7[%c0, %c0_0, %c0_1, %c0_2] : memref<1x4x2x128xf32, #tpu.memory_space<vmem>>, vector<1x4x2x128xf32>
    %1 = vector.shape_cast %0 : vector<1x4x2x128xf32> to vector<4x2x128xf32>
    %c0_3 = arith.constant 0 : index
    %c0_4 = arith.constant 0 : index
    %c0_5 = arith.constant 0 : index
    %c0_6 = arith.constant 0 : index
    %2 = vector.load %arg8[%c0_3, %c0_4, %c0_5, %c0_6] : memref<1x4x2x128xf32, #tpu.memory_space<vmem>>, vector<1x4x2x128xf32>
    %3 = vector.shape_cast %2 : vector<1x4x2x128xf32> to vector<4x2x128xf32>
    %c0_7 = arith.constant 0 : index
    %4 = memref.load %arg6[%c0_7] : memref<1xf32, #tpu.memory_space<smem>>
    %5 = vector.broadcast %4 : f32 to vector<2x128xf32>
    %c0_8 = arith.constant 0 : index
    %6 = memref.load %arg4[%c0_8] : memref<2xf32, #tpu.memory_space<smem>>
    %7 = vector.broadcast %6 : f32 to vector<2x128xf32>
    %c0_9 = arith.constant 0 : index
    %c0_10 = arith.constant 0 : index
    %8 = memref.load %arg2[%c0_9, %c0_10] : memref<4x2xf32, #tpu.memory_space<smem>>
    %9 = vector.extract_strided_slice %1 {offsets = [0, 0, 0], sizes = [1, 2, 128], strides = [1, 1, 1]} : vector<4x2x128xf32> to vector<1x2x128xf32>
    %10 = vector.shape_cast %9 : vector<1x2x128xf32> to vector<2x128xf32>
    %11 = vector.broadcast %8 : f32 to vector<2x128xf32>
    %12 = arith.mulf %11, %10 : vector<2x128xf32>
    %13 = arith.addf %7, %12 : vector<2x128xf32>
    %c1 = arith.constant 1 : index
    %c0_11 = arith.constant 0 : index
    %14 = memref.load %arg2[%c1, %c0_11] : memref<4x2xf32, #tpu.memory_space<smem>>
    %15 = vector.extract_strided_slice %1 {offsets = [1, 0, 0], sizes = [1, 2, 128], strides = [1, 1, 1]} : vector<4x2x128xf32> to vector<1x2x128xf32>
    %16 = vector.shape_cast %15 : vector<1x2x128xf32> to vector<2x128xf32>
    %17 = vector.broadcast %14 : f32 to vector<2x128xf32>
    %18 = arith.mulf %17, %16 : vector<2x128xf32>
    %19 = arith.addf %13, %18 : vector<2x128xf32>
    %c2 = arith.constant 2 : index
    %c0_12 = arith.constant 0 : index
    %20 = memref.load %arg2[%c2, %c0_12] : memref<4x2xf32, #tpu.memory_space<smem>>
    %21 = vector.extract_strided_slice %1 {offsets = [2, 0, 0], sizes = [1, 2, 128], strides = [1, 1, 1]} : vector<4x2x128xf32> to vector<1x2x128xf32>
    %22 = vector.shape_cast %21 : vector<1x2x128xf32> to vector<2x128xf32>
    %23 = vector.broadcast %20 : f32 to vector<2x128xf32>
    %24 = arith.mulf %23, %22 : vector<2x128xf32>
    %25 = arith.addf %19, %24 : vector<2x128xf32>
    %c3 = arith.constant 3 : index
    %c0_13 = arith.constant 0 : index
    %26 = memref.load %arg2[%c3, %c0_13] : memref<4x2xf32, #tpu.memory_space<smem>>
    %27 = vector.extract_strided_slice %1 {offsets = [3, 0, 0], sizes = [1, 2, 128], strides = [1, 1, 1]} : vector<4x2x128xf32> to vector<1x2x128xf32>
    %28 = vector.shape_cast %27 : vector<1x2x128xf32> to vector<2x128xf32>
    %29 = vector.broadcast %26 : f32 to vector<2x128xf32>
    %30 = arith.mulf %29, %28 : vector<2x128xf32>
    %31 = arith.addf %25, %30 : vector<2x128xf32>
    %c0_14 = arith.constant 0 : index
    %c0_15 = arith.constant 0 : index
    %32 = memref.load %arg3[%c0_14, %c0_15] : memref<4x2xf32, #tpu.memory_space<smem>>
    %33 = vector.extract_strided_slice %3 {offsets = [0, 0, 0], sizes = [1, 2, 128], strides = [1, 1, 1]} : vector<4x2x128xf32> to vector<1x2x128xf32>
    %34 = vector.shape_cast %33 : vector<1x2x128xf32> to vector<2x128xf32>
    %35 = vector.broadcast %32 : f32 to vector<2x128xf32>
    %36 = arith.mulf %35, %34 : vector<2x128xf32>
    %37 = arith.addf %31, %36 : vector<2x128xf32>
    %c1_16 = arith.constant 1 : index
    %c0_17 = arith.constant 0 : index
    %38 = memref.load %arg3[%c1_16, %c0_17] : memref<4x2xf32, #tpu.memory_space<smem>>
    %39 = vector.extract_strided_slice %3 {offsets = [1, 0, 0], sizes = [1, 2, 128], strides = [1, 1, 1]} : vector<4x2x128xf32> to vector<1x2x128xf32>
    %40 = vector.shape_cast %39 : vector<1x2x128xf32> to vector<2x128xf32>
    %41 = vector.broadcast %38 : f32 to vector<2x128xf32>
    %42 = arith.mulf %41, %40 : vector<2x128xf32>
    %43 = arith.addf %37, %42 : vector<2x128xf32>
    %c2_18 = arith.constant 2 : index
    %c0_19 = arith.constant 0 : index
    %44 = memref.load %arg3[%c2_18, %c0_19] : memref<4x2xf32, #tpu.memory_space<smem>>
    %45 = vector.extract_strided_slice %3 {offsets = [2, 0, 0], sizes = [1, 2, 128], strides = [1, 1, 1]} : vector<4x2x128xf32> to vector<1x2x128xf32>
    %46 = vector.shape_cast %45 : vector<1x2x128xf32> to vector<2x128xf32>
    %47 = vector.broadcast %44 : f32 to vector<2x128xf32>
    %48 = arith.mulf %47, %46 : vector<2x128xf32>
    %49 = arith.addf %43, %48 : vector<2x128xf32>
    %c3_20 = arith.constant 3 : index
    %c0_21 = arith.constant 0 : index
    %50 = memref.load %arg3[%c3_20, %c0_21] : memref<4x2xf32, #tpu.memory_space<smem>>
    %51 = vector.extract_strided_slice %3 {offsets = [3, 0, 0], sizes = [1, 2, 128], strides = [1, 1, 1]} : vector<4x2x128xf32> to vector<1x2x128xf32>
    %52 = vector.shape_cast %51 : vector<1x2x128xf32> to vector<2x128xf32>
    %53 = vector.broadcast %50 : f32 to vector<2x128xf32>
    %54 = arith.mulf %53, %52 : vector<2x128xf32>
    %55 = arith.addf %49, %54 : vector<2x128xf32>
    %c0_22 = arith.constant 0 : index
    %56 = memref.load %arg5[%c0_22] : memref<2xf32, #tpu.memory_space<smem>>
    %cst = arith.constant 0.000000e+00 : f32
    %57 = vector.broadcast %cst : f32 to vector<2x128xf32>
    %58 = arith.maximumf %55, %57 : vector<2x128xf32>
    %59 = vector.broadcast %56 : f32 to vector<2x128xf32>
    %60 = arith.mulf %59, %58 : vector<2x128xf32>
    %61 = arith.addf %5, %60 : vector<2x128xf32>
    %c1_23 = arith.constant 1 : index
    %62 = memref.load %arg4[%c1_23] : memref<2xf32, #tpu.memory_space<smem>>
    %63 = vector.broadcast %62 : f32 to vector<2x128xf32>
    %c0_24 = arith.constant 0 : index
    %c1_25 = arith.constant 1 : index
    %64 = memref.load %arg2[%c0_24, %c1_25] : memref<4x2xf32, #tpu.memory_space<smem>>
    %65 = vector.extract_strided_slice %1 {offsets = [0, 0, 0], sizes = [1, 2, 128], strides = [1, 1, 1]} : vector<4x2x128xf32> to vector<1x2x128xf32>
    %66 = vector.shape_cast %65 : vector<1x2x128xf32> to vector<2x128xf32>
    %67 = vector.broadcast %64 : f32 to vector<2x128xf32>
    %68 = arith.mulf %67, %66 : vector<2x128xf32>
    %69 = arith.addf %63, %68 : vector<2x128xf32>
    %c1_26 = arith.constant 1 : index
    %c1_27 = arith.constant 1 : index
    %70 = memref.load %arg2[%c1_26, %c1_27] : memref<4x2xf32, #tpu.memory_space<smem>>
    %71 = vector.extract_strided_slice %1 {offsets = [1, 0, 0], sizes = [1, 2, 128], strides = [1, 1, 1]} : vector<4x2x128xf32> to vector<1x2x128xf32>
    %72 = vector.shape_cast %71 : vector<1x2x128xf32> to vector<2x128xf32>
    %73 = vector.broadcast %70 : f32 to vector<2x128xf32>
    %74 = arith.mulf %73, %72 : vector<2x128xf32>
    %75 = arith.addf %69, %74 : vector<2x128xf32>
    %c2_28 = arith.constant 2 : index
    %c1_29 = arith.constant 1 : index
    %76 = memref.load %arg2[%c2_28, %c1_29] : memref<4x2xf32, #tpu.memory_space<smem>>
    %77 = vector.extract_strided_slice %1 {offsets = [2, 0, 0], sizes = [1, 2, 128], strides = [1, 1, 1]} : vector<4x2x128xf32> to vector<1x2x128xf32>
    %78 = vector.shape_cast %77 : vector<1x2x128xf32> to vector<2x128xf32>
    %79 = vector.broadcast %76 : f32 to vector<2x128xf32>
    %80 = arith.mulf %79, %78 : vector<2x128xf32>
    %81 = arith.addf %75, %80 : vector<2x128xf32>
    %c3_30 = arith.constant 3 : index
    %c1_31 = arith.constant 1 : index
    %82 = memref.load %arg2[%c3_30, %c1_31] : memref<4x2xf32, #tpu.memory_space<smem>>
    %83 = vector.extract_strided_slice %1 {offsets = [3, 0, 0], sizes = [1, 2, 128], strides = [1, 1, 1]} : vector<4x2x128xf32> to vector<1x2x128xf32>
    %84 = vector.shape_cast %83 : vector<1x2x128xf32> to vector<2x128xf32>
    %85 = vector.broadcast %82 : f32 to vector<2x128xf32>
    %86 = arith.mulf %85, %84 : vector<2x128xf32>
    %87 = arith.addf %81, %86 : vector<2x128xf32>
    %c0_32 = arith.constant 0 : index
    %c1_33 = arith.constant 1 : index
    %88 = memref.load %arg3[%c0_32, %c1_33] : memref<4x2xf32, #tpu.memory_space<smem>>
    %89 = vector.extract_strided_slice %3 {offsets = [0, 0, 0], sizes = [1, 2, 128], strides = [1, 1, 1]} : vector<4x2x128xf32> to vector<1x2x128xf32>
    %90 = vector.shape_cast %89 : vector<1x2x128xf32> to vector<2x128xf32>
    %91 = vector.broadcast %88 : f32 to vector<2x128xf32>
    %92 = arith.mulf %91, %90 : vector<2x128xf32>
    %93 = arith.addf %87, %92 : vector<2x128xf32>
    %c1_34 = arith.constant 1 : index
    %c1_35 = arith.constant 1 : index
    %94 = memref.load %arg3[%c1_34, %c1_35] : memref<4x2xf32, #tpu.memory_space<smem>>
    %95 = vector.extract_strided_slice %3 {offsets = [1, 0, 0], sizes = [1, 2, 128], strides = [1, 1, 1]} : vector<4x2x128xf32> to vector<1x2x128xf32>
    %96 = vector.shape_cast %95 : vector<1x2x128xf32> to vector<2x128xf32>
    %97 = vector.broadcast %94 : f32 to vector<2x128xf32>
    %98 = arith.mulf %97, %96 : vector<2x128xf32>
    %99 = arith.addf %93, %98 : vector<2x128xf32>
    %c2_36 = arith.constant 2 : index
    %c1_37 = arith.constant 1 : index
    %100 = memref.load %arg3[%c2_36, %c1_37] : memref<4x2xf32, #tpu.memory_space<smem>>
    %101 = vector.extract_strided_slice %3 {offsets = [2, 0, 0], sizes = [1, 2, 128], strides = [1, 1, 1]} : vector<4x2x128xf32> to vector<1x2x128xf32>
    %102 = vector.shape_cast %101 : vector<1x2x128xf32> to vector<2x128xf32>
    %103 = vector.broadcast %100 : f32 to vector<2x128xf32>
    %104 = arith.mulf %103, %102 : vector<2x128xf32>
    %105 = arith.addf %99, %104 : vector<2x128xf32>
    %c3_38 = arith.constant 3 : index
    %c1_39 = arith.constant 1 : index
    %106 = memref.load %arg3[%c3_38, %c1_39] : memref<4x2xf32, #tpu.memory_space<smem>>
    %107 = vector.extract_strided_slice %3 {offsets = [3, 0, 0], sizes = [1, 2, 128], strides = [1, 1, 1]} : vector<4x2x128xf32> to vector<1x2x128xf32>
    %108 = vector.shape_cast %107 : vector<1x2x128xf32> to vector<2x128xf32>
    %109 = vector.broadcast %106 : f32 to vector<2x128xf32>
    %110 = arith.mulf %109, %108 : vector<2x128xf32>
    %111 = arith.addf %105, %110 : vector<2x128xf32>
    %c1_40 = arith.constant 1 : index
    %112 = memref.load %arg5[%c1_40] : memref<2xf32, #tpu.memory_space<smem>>
    %cst_41 = arith.constant 0.000000e+00 : f32
    %113 = vector.broadcast %cst_41 : f32 to vector<2x128xf32>
    %114 = arith.maximumf %111, %113 : vector<2x128xf32>
    %115 = vector.broadcast %112 : f32 to vector<2x128xf32>
    %116 = arith.mulf %115, %114 : vector<2x128xf32>
    %117 = arith.addf %61, %116 : vector<2x128xf32>
    %118 = arith.negf %117 : vector<2x128xf32>
    %119 = math.exp %118 : vector<2x128xf32>
    %cst_42 = arith.constant 1.000000e+00 : f32
    %120 = vector.broadcast %cst_42 : f32 to vector<2x128xf32>
    %121 = arith.addf %120, %119 : vector<2x128xf32>
    %122 = arith.divf %120, %121 : vector<2x128xf32>
    %123 = vector.shape_cast %122 : vector<2x128xf32> to vector<1x2x128xf32>
    %124 = vector.broadcast %123 : vector<1x2x128xf32> to vector<4x2x128xf32>
    %125 = arith.mulf %3, %124 : vector<4x2x128xf32>
    %c0_43 = arith.constant 0 : index
    %c0_44 = arith.constant 0 : index
    %c0_45 = arith.constant 0 : index
    %c0_46 = arith.constant 0 : index
    %126 = vector.load %arg9[%c0_43, %c0_44, %c0_45, %c0_46] : memref<1x4x2x128xf32, #tpu.memory_space<vmem>>, vector<1x4x2x128xf32>
    %127 = vector.shape_cast %126 : vector<1x4x2x128xf32> to vector<4x2x128xf32>
    %128 = vector.shape_cast %125 : vector<4x2x128xf32> to vector<1x4x2x128xf32>
    tpu.vector_store %arg9[%c0_43, %c0_44, %c0_45, %c0_46], %128 {strides = array<i32>} : memref<1x4x2x128xf32, #tpu.memory_space<vmem>>, vector<1x4x2x128xf32>,
    return
  }
  func.func @transform_0(%arg0: i32, %arg1: i32) -> (i32, i32) {
    %c0_i32 = arith.constant 0 : i32
    %c0_i32_0 = arith.constant 0 : i32
    %c0_i32_1 = arith.constant 0 : i32
    return %c0_i32, %c0_i32_0 : i32, i32
  }
  func.func @transform_1(%arg0: i32, %arg1: i32) -> (i32, i32) {
    %c0_i32 = arith.constant 0 : i32
    %c0_i32_0 = arith.constant 0 : i32
    %c0_i32_1 = arith.constant 0 : i32
    return %c0_i32, %c0_i32_0 : i32, i32
  }
  func.func @transform_2(%arg0: i32, %arg1: i32) -> i32 {
    %c0_i32 = arith.constant 0 : i32
    %c0_i32_0 = arith.constant 0 : i32
    return %c0_i32 : i32
  }
  func.func @transform_3(%arg0: i32, %arg1: i32) -> i32 {
    %c0_i32 = arith.constant 0 : i32
    %c0_i32_0 = arith.constant 0 : i32
    return %c0_i32 : i32
  }
  func.func @transform_4(%arg0: i32, %arg1: i32) -> i32 {
    %c0_i32 = arith.constant 0 : i32
    %c0_i32_0 = arith.constant 0 : i32
    return %c0_i32 : i32
  }
  func.func @transform_5(%arg0: i32, %arg1: i32) -> (i32, i32, i32, i32) {
    %c0_i32 = arith.constant 0 : i32
    %c0_i32_0 = arith.constant 0 : i32
    %c0_i32_1 = arith.constant 0 : i32
    return %arg0, %c0_i32, %arg1, %c0_i32_0 : i32, i32, i32, i32
  }
  func.func @transform_6(%arg0: i32, %arg1: i32) -> (i32, i32, i32, i32) {
    %c0_i32 = arith.constant 0 : i32
    %c0_i32_0 = arith.constant 0 : i32
    %c0_i32_1 = arith.constant 0 : i32
    return %arg0, %c0_i32, %arg1, %c0_i32_0 : i32, i32, i32, i32
  }
  func.func @transform_7(%arg0: i32, %arg1: i32) -> (i32, i32, i32, i32) {
    %c0_i32 = arith.constant 0 : i32
    %c0_i32_0 = arith.constant 0 : i32
    %c0_i32_1 = arith.constant 0 : i32
    return %arg0, %c0_i32, %arg1, %c0_i32_0 : i32, i32, i32, i32
  }
}

</mosaic_0001>

<llo_original>
// kernel: attention_gate.1
$region0: #{attention_gate.1}
  #allocation0 [shape = 'u32[]', space=smem, size = 0x4, offset = 0x4, fixed_abs, tag = 'smem constant byte address 0x4 - core index']
  #allocation1 [shape = 'u32[144,128]{1,0:T(1,128)}', space=vmem, size = 0x12000, scoped, tag = 'internal scratch']
  #allocation2 [shape = 'f32[1]{0:T(128)S(6)}', space=smem, size = 0x200, scoped, tag = 'scoped memory for attention_gate.1']
  %s0 = inlined_call_operand.vmem [shape: f32[4,2], index: 0, kind: input, shape index: {}]
  %s1 = inlined_call_operand.vmem [shape: f32[4,2], index: 1, kind: input, shape index: {}]
  %s2 = inlined_call_operand.vmem [shape: f32[2], index: 2, kind: input, shape index: {}]
  %s3 = inlined_call_operand.vmem [shape: f32[2], index: 3, kind: input, shape index: {}]
  %s4 = inlined_call_operand.<no memory space> [shape: f32[1], index: 4, kind: input, shape index: {}]
  %s5 = inlined_call_operand.vmem [shape: f32[2,4,2,128], index: 5, kind: input, shape index: {}]
  %s6 = inlined_call_operand.vmem [shape: f32[2,4,2,128], index: 6, kind: input, shape index: {}]
  %s7 = inlined_call_operand.vmem [shape: f32[2,4,2,128], index: 7, kind: output, shape index: {}]
  %s8 = sld [smem:[#allocation0]]
  $region77: #{attention_gate.1} parent=0
    _
  %s10 = ssub.s32 1, %s8
  %s11 = scalar_select 0, %s10, %s8
  %12 = sst [smem:[#allocation2]] %s4
  $region1: #{attention_gate.1} parent=0
    #allocation3 [shape = 'u8[2048]{0}', space=smem, size = 0x800, scoped, tag = 'input window, operand 0, single buffered']
    #allocation4 [shape = 's32[2]{0}', space=sflag, size = 0x8, scoped, tag = 'scoped memory for attention_gate.1']
    #allocation5 [shape = 'u8[2048]{0}', space=smem, size = 0x800, scoped, tag = 'input window, operand 1, single buffered']
    #allocation6 [shape = 's32[1]{0}', space=sflag, size = 0x4, scoped, tag = 'scoped memory for attention_gate.1']
    #allocation7 [shape = 'u8[512]{0}', space=smem, size = 0x200, scoped, tag = 'input window, operand 2, single buffered']
    #allocation8 [shape = 'u8[512]{0}', space=smem, size = 0x200, scoped, tag = 'input window, operand 3, single buffered']
    #allocation9 [shape = 's32[1]{0}', space=sflag, size = 0x4, scoped, tag = 'scoped memory for attention_gate.1']
    %13 = vsyncpa [#allocation4], 0
    %14 = vsyncpa [#allocation6], 0
    %15 = vsyncpa [#allocation9], 0
    loop: start=0, step=1, limit=4
    $region2: #{attention_gate.1} parent=1 // loop_pre_header
      _
    $region3: #{attention_gate.1} parent=1 // loop_header
      %s17 = sphi 0, %s21
      %p18 = scmp.ge.s32.totalorder %s17, 4
      %s24 = sphi 0, %s36
      %s25 = sphi 0, %s32
      %s26 = sphi 0, %s24
      %s27 = sphi 0, %s25
      %s28 = sphi 0, %s26
      %s29 = sphi 0, %s27
      %s37 = sphi 0, %s37
      %s39 = sphi 0, %s37
      %s40 = sphi 0, %s39
      %s54 = sphi 0, %s40
      %s58 = sphi 0, %s58
      %s60 = sphi 0, %s58
      %s61 = sphi 0, %s60
      %s75 = sphi 0, %s61
      %s79 = sphi 0, %s79
      %s81 = sphi 0, %s79
      %s82 = sphi 0, %s81
      %s96 = sphi 0, %s82
      %s100 = sphi 0, %s100
      %s102 = sphi 0, %s100
      %s103 = sphi 0, %s102
      %s117 = sphi 0, %s103
      %s121 = sphi 0, %s121
      %s123 = sphi 0, %s121
      %s124 = sphi 0, %s123
      %s138 = sphi 0, %s124
      %s146 = sphi 0, %s148
      %s149 = sphi 0, %s146
      %s150 = sphi 0, %s149
      %s166 = sphi 0, %s150
      %s174 = sphi 0, %s176
      %s177 = sphi 0, %s174
      %s178 = sphi 0, %s177
      %s194 = sphi 0, %s178
      %s202 = sphi 0, %s204
      %s205 = sphi 0, %s202
      %s206 = sphi 0, %s205
      %s222 = sphi 0, %s206
    $region4: #{attention_gate.1} parent=1 // loop_header_branch
      %20 = sbr.rel (%p18) target = $region8
    $region5: #{attention_gate.1} parent=1 // loop_body
      %s22 = ssub.s32 %s17, 1
      %s23 = ssub.s32 %s17, 2
      %s30 = sadd.s32 1, %s25
      %p31 = scmp.ge.s32.totalorder %s30, 1
      %s32 = scalar_select %p31, 0, %s30
      %s33 = sadd.s32 1, %s24
      %s34 = scalar_select %p31, %s33, %s24
      %p35 = scmp.ge.s32.totalorder %s34, 2
      %s36 = scalar_select %p35, 0, %s34
      %s38 = sadd.s32 %s37, 1
      %p41 = scmp.eq.s32.totalorder %s17, 1
      %p42 = scmp.ne.s32.totalorder %s37, %s39
      %p43 = scmp.eq.s32.totalorder %s17, 0
      %p44 = por %p42, %p43
      %p45 = scmp.ne.s32.totalorder %s37, %s39
      %p46 = scmp.eq.s32.totalorder %s22, 1
      %p47 = por %p45, %p46
      %p48 = scmp.ne.s32.totalorder %s39, %s40
      %p49 = scmp.eq.s32.totalorder %s22, 0
      %p50 = por %p48, %p49
      %p51 = scmp.ne.s32.totalorder %s39, %s40
      %p52 = scmp.eq.s32.totalorder %s23, 1
      %p53 = por %p51, %p52
      %p55 = scmp.ne.s32.totalorder %s40, %s54
      %p56 = scmp.eq.s32.totalorder %s23, 0
      %p57 = por %p55, %p56
      %s59 = sadd.s32 %s58, 1
      %p62 = scmp.eq.s32.totalorder %s17, 1
      %p63 = scmp.ne.s32.totalorder %s58, %s60
      %p64 = scmp.eq.s32.totalorder %s17, 0
      %p65 = por %p63, %p64
      %p66 = scmp.ne.s32.totalorder %s58, %s60
      %p67 = scmp.eq.s32.totalorder %s22, 1
      %p68 = por %p66, %p67
      %p69 = scmp.ne.s32.totalorder %s60, %s61
      %p70 = scmp.eq.s32.totalorder %s22, 0
      %p71 = por %p69, %p70
      %p72 = scmp.ne.s32.totalorder %s60, %s61
      %p73 = scmp.eq.s32.totalorder %s23, 1
      %p74 = por %p72, %p73
      %p76 = scmp.ne.s32.totalorder %s61, %s75
      %p77 = scmp.eq.s32.totalorder %s23, 0
      %p78 = por %p76, %p77
      %s80 = sadd.s32 %s79, 1
      %p83 = scmp.eq.s32.totalorder %s17, 1
      %p84 = scmp.ne.s32.totalorder %s79, %s81
      %p85 = scmp.eq.s32.totalorder %s17, 0
      %p86 = por %p84, %p85
      %p87 = scmp.ne.s32.totalorder %s79, %s81
      %p88 = scmp.eq.s32.totalorder %s22, 1
      %p89 = por %p87, %p88
      %p90 = scmp.ne.s32.totalorder %s81, %s82
      %p91 = scmp.eq.s32.totalorder %s22, 0
      %p92 = por %p90, %p91
      %p93 = scmp.ne.s32.totalorder %s81, %s82
      %p94 = scmp.eq.s32.totalorder %s23, 1
      %p95 = por %p93, %p94
      %p97 = scmp.ne.s32.totalorder %s82, %s96
      %p98 = scmp.eq.s32.totalorder %s23, 0
      %p99 = por %p97, %p98
      %s101 = sadd.s32 %s100, 1
      %p104 = scmp.eq.s32.totalorder %s17, 1
      %p105 = scmp.ne.s32.totalorder %s100, %s102
      %p106 = scmp.eq.s32.totalorder %s17, 0
      %p107 = por %p105, %p106
      %p108 = scmp.ne.s32.totalorder %s100, %s102
      %p109 = scmp.eq.s32.totalorder %s22, 1
      %p110 = por %p108, %p109
      %p111 = scmp.ne.s32.totalorder %s102, %s103
      %p112 = scmp.eq.s32.totalorder %s22, 0
      %p113 = por %p111, %p112
      %p114 = scmp.ne.s32.totalorder %s102, %s103
      %p115 = scmp.eq.s32.totalorder %s23, 1
      %p116 = por %p114, %p115
      %p118 = scmp.ne.s32.totalorder %s103, %s117
      %p119 = scmp.eq.s32.totalorder %s23, 0
      %p120 = por %p118, %p119
      %s122 = sadd.s32 %s121, 1
      %p125 = scmp.eq.s32.totalorder %s17, 1
      %p126 = scmp.ne.s32.totalorder %s121, %s123
      %p127 = scmp.eq.s32.totalorder %s17, 0
      %p128 = por %p126, %p127
      %p129 = scmp.ne.s32.totalorder %s121, %s123
      %p130 = scmp.eq.s32.totalorder %s22, 1
      %p131 = por %p129, %p130
      %p132 = scmp.ne.s32.totalorder %s123, %s124
      %p133 = scmp.eq.s32.totalorder %s22, 0
      %p134 = por %p132, %p133
      %p135 = scmp.ne.s32.totalorder %s123, %s124
      %p136 = scmp.eq.s32.totalorder %s23, 1
      %p137 = por %p135, %p136
      %p139 = scmp.ne.s32.totalorder %s124, %s138
      %p140 = scmp.eq.s32.totalorder %s23, 0
      %p141 = por %p139, %p140
      %s142 = ssub.s32 %s24, %s36
      %s143 = ssub.s32 %s25, %s32
      %s144 = sor.u32 %s142, %s143
      %p145 = scmp.eq.s32.totalorder %s144, 0
      %s147 = sadd.s32 %s146, 1
      %s148 = scalar_select %p145, %s146, %s147
      %p151 = pneg %p145
      %p152 = scmp.eq.s32.totalorder %s17, 1
      %p153 = por %p151, %p152
      %p154 = scmp.ne.s32.totalorder %s146, %s149
      %p155 = scmp.eq.s32.totalorder %s17, 0
      %p156 = por %p154, %p155
      %p157 = scmp.ne.s32.totalorder %s146, %s149
      %p158 = scmp.eq.s32.totalorder %s22, 1
      %p159 = por %p157, %p158
      %p160 = scmp.ne.s32.totalorder %s149, %s150
      %p161 = scmp.eq.s32.totalorder %s22, 0
      %p162 = por %p160, %p161
      %p163 = scmp.ne.s32.totalorder %s149, %s150
      %p164 = scmp.eq.s32.totalorder %s23, 1
      %p165 = por %p163, %p164
      %p167 = scmp.ne.s32.totalorder %s150, %s166
      %p168 = scmp.eq.s32.totalorder %s23, 0
      %p169 = por %p167, %p168
      %s170 = ssub.s32 %s24, %s36
      %s171 = ssub.s32 %s25, %s32
      %s172 = sor.u32 %s170, %s171
      %p173 = scmp.eq.s32.totalorder %s172, 0
      %s175 = sadd.s32 %s174, 1
      %s176 = scalar_select %p173, %s174, %s175
      %p179 = pneg %p173
      %p180 = scmp.eq.s32.totalorder %s17, 1
      %p181 = por %p179, %p180
      %p182 = scmp.ne.s32.totalorder %s174, %s177
      %p183 = scmp.eq.s32.totalorder %s17, 0
      %p184 = por %p182, %p183
      %p185 = scmp.ne.s32.totalorder %s174, %s177
      %p186 = scmp.eq.s32.totalorder %s22, 1
      %p187 = por %p185, %p186
      %p188 = scmp.ne.s32.totalorder %s177, %s178
      %p189 = scmp.eq.s32.totalorder %s22, 0
      %p190 = por %p188, %p189
      %p191 = scmp.ne.s32.totalorder %s177, %s178
      %p192 = scmp.eq.s32.totalorder %s23, 1
      %p193 = por %p191, %p192
      %p195 = scmp.ne.s32.totalorder %s178, %s194
      %p196 = scmp.eq.s32.totalorder %s23, 0
      %p197 = por %p195, %p196
      %s198 = ssub.s32 %s24, %s36
      %s199 = ssub.s32 %s25, %s32
      %s200 = sor.u32 %s198, %s199
      %p201 = scmp.eq.s32.totalorder %s200, 0
      %s203 = sadd.s32 %s202, 1
      %s204 = scalar_select %p201, %s202, %s203
      %p207 = pneg %p201
      %p208 = scmp.eq.s32.totalorder %s17, 1
      %p209 = por %p207, %p208
      %p210 = scmp.ne.s32.totalorder %s202, %s205
      %p211 = scmp.eq.s32.totalorder %s17, 0
      %p212 = por %p210, %p211
      %p213 = scmp.ne.s32.totalorder %s202, %s205
      %p214 = scmp.eq.s32.totalorder %s22, 1
      %p215 = por %p213, %p214
      %p216 = scmp.ne.s32.totalorder %s205, %s206
      %p217 = scmp.eq.s32.totalorder %s22, 0
      %p218 = por %p216, %p217
      %p219 = scmp.ne.s32.totalorder %s205, %s206
      %p220 = scmp.eq.s32.totalorder %s23, 1
      %p221 = por %p219, %p220
      %p223 = scmp.ne.s32.totalorder %s206, %s222
      %p224 = scmp.eq.s32.totalorder %s23, 0
      %p225 = por %p223, %p224
      %p226 = scmp.le.s32.totalorder 1, %s17
      %p227 = scmp.lt.s32.totalorder %s17, 3
      %p228 = pnand %p226, %p227
      %p229 = pneg %p228
      // Predicated region
      $region9: #{attention_gate.1} parent=5 // pred_check
        _
      $region10: #{attention_gate.1} parent=5 // pred_check_branch
        %231 = sbr.rel (%p228) target = $region12
      $region11: #{attention_gate.1} parent=5 // pred_region
        %s232 = ssub.s32 %s17, 1
        // Predicated region
        $region13: #{attention_gate.1} parent=11 // pred_check
          %p233 = pneg %p50
        $region14: #{attention_gate.1} parent=11 // pred_check_branch
          %235 = sbr.rel (%p233) target = $region16
        $region15: #{attention_gate.1} parent=11 // pred_region
          %s237 = ssub.s32 64, 64
          %238 = vsyncadd [#allocation4], %s237
          %s240 = sshll.u32 %s0, 4
          %s241 = int_to_ptr.vmem [resolvable:$true] %s240
          %243 = dma.vmem_to_smem %s241, 64, [#allocation3], [#allocation4]
        $region16: #{attention_gate.1} parent=11 // pred_fallthru
          _
        // Predicated region
        $region17: #{attention_gate.1} parent=11 // pred_check
          %p244 = pneg %p71
        $region18: #{attention_gate.1} parent=11 // pred_check_branch
          %246 = sbr.rel (%p244) target = $region20
        $region19: #{attention_gate.1} parent=11 // pred_region
          %s248 = ssub.s32 64, 64
          %249 = vsyncadd [#allocation6], %s248
          %s251 = sshll.u32 %s1, 4
          %s252 = int_to_ptr.vmem [resolvable:$true] %s251
          %254 = dma.vmem_to_smem %s252, 64, [#allocation5], [#allocation6]
        $region20: #{attention_gate.1} parent=11 // pred_fallthru
          _
        // Predicated region
        $region21: #{attention_gate.1} parent=11 // pred_check
          %p255 = pneg %p92
        $region22: #{attention_gate.1} parent=11 // pred_check_branch
          %257 = sbr.rel (%p255) target = $region24
        $region23: #{attention_gate.1} parent=11 // pred_region
          %s259 = ssub.s32 16, 16
          %260 = vsyncadd [#allocation6], %s259
          %s262 = sshll.u32 %s2, 4
          %s263 = int_to_ptr.vmem [resolvable:$true] %s262
          %265 = dma.vmem_to_smem %s263, 16, [#allocation7], [#allocation6]
        $region24: #{attention_gate.1} parent=11 // pred_fallthru
          _
        // Predicated region
        $region25: #{attention_gate.1} parent=11 // pred_check
          %p266 = pneg %p113
        $region26: #{attention_gate.1} parent=11 // pred_check_branch
          %268 = sbr.rel (%p266) target = $region28
        $region27: #{attention_gate.1} parent=11 // pred_region
          %s270 = ssub.s32 16, 16
          %271 = vsyncadd [#allocation9], %s270
          %s273 = sshll.u32 %s3, 4
          %s274 = int_to_ptr.vmem [resolvable:$true] %s273
          %276 = dma.vmem_to_smem %s274, 16, [#allocation8], [#allocation9]
        $region28: #{attention_gate.1} parent=11 // pred_fallthru
          _
        // Predicated region
        $region29: #{attention_gate.1} parent=11 // pred_check
          %p277 = pneg %p134
        $region30: #{attention_gate.1} parent=11 // pred_check_branch
          %279 = sbr.rel (%p277) target = $region32
        $region31: #{attention_gate.1} parent=11 // pred_region
          _
        $region32: #{attention_gate.1} parent=11 // pred_fallthru
          _
      $region12: #{attention_gate.1} parent=5 // pred_fallthru
        _
      %p280 = scmp.lt.s32.totalorder %s17, 2
      // Predicated region
      $region33: #{attention_gate.1} parent=5 // pred_check
        %p281 = pneg %p280
      $region34: #{attention_gate.1} parent=5 // pred_check_branch
        %283 = sbr.rel (%p281) target = $region36
      $region35: #{attention_gate.1} parent=5 // pred_region
        // Predicated region
        $region37: #{attention_gate.1} parent=35 // pred_check
          %p284 = pneg %p156
        $region38: #{attention_gate.1} parent=35 // pred_check_branch
          %286 = sbr.rel (%p284) target = $region40
        $region39: #{attention_gate.1} parent=35 // pred_region
          %p287 = scmp.lt.s32.totalorder %s24, 1
          %s288 = scalar_select %p287, %s24, 1
          %p289 = scmp.lt.s32.totalorder %s25, 0
          %s290 = scalar_select %p289, %s25, 0
          %s291 = smul.addr %s288, 4
          %s292 = sadd.s32 %s290, %s291
          %s293 = smul.addr %s292, 2
          %s294 = scalar_lea.vmem %s5, %s293
        $region40: #{attention_gate.1} parent=35 // pred_fallthru
          _
        // Predicated region
        $region41: #{attention_gate.1} parent=35 // pred_check
          %p295 = pneg %p184
        $region42: #{attention_gate.1} parent=35 // pred_check_branch
          %297 = sbr.rel (%p295) target = $region44
        $region43: #{attention_gate.1} parent=35 // pred_region
          %p298 = scmp.lt.s32.totalorder %s24, 1
          %s299 = scalar_select %p298, %s24, 1
          %p300 = scmp.lt.s32.totalorder %s25, 0
          %s301 = scalar_select %p300, %s25, 0
          %s302 = smul.addr %s299, 4
          %s303 = sadd.s32 %s301, %s302
          %s304 = smul.addr %s303, 2
          %s305 = scalar_lea.vmem %s6, %s304
        $region44: #{attention_gate.1} parent=35 // pred_fallthru
          _
      $region36: #{attention_gate.1} parent=5 // pred_fallthru
        _
      %p306 = scmp.le.s32.totalorder 1, %s17
      %p307 = scmp.lt.s32.totalorder %s17, 3
      %p308 = pnand %p306, %p307
      %p309 = pneg %p308
      // Predicated region
      $region45: #{attention_gate.1} parent=5 // pred_check
        _
      $region46: #{attention_gate.1} parent=5 // pred_check_branch
        %311 = sbr.rel (%p308) target = $region48
      $region47: #{attention_gate.1} parent=5 // pred_region
        %s312 = ssub.s32 %s17, 1
        // Predicated region
        $region49: #{attention_gate.1} parent=47 // pred_check
          %p313 = pneg %p50
        $region50: #{attention_gate.1} parent=47 // pred_check_branch
          %315 = sbr.rel (%p313) target = $region52
        $region51: #{attention_gate.1} parent=47 // pred_region
          %316 = dma.done [#allocation4], 64
        $region52: #{attention_gate.1} parent=47 // pred_fallthru
          _
        // Predicated region
        $region53: #{attention_gate.1} parent=47 // pred_check
          %p317 = pneg %p71
        $region54: #{attention_gate.1} parent=47 // pred_check_branch
          %319 = sbr.rel (%p317) target = $region56
        $region55: #{attention_gate.1} parent=47 // pred_region
          %320 = dma.done [#allocation6], 64
        $region56: #{attention_gate.1} parent=47 // pred_fallthru
          _
        // Predicated region
        $region57: #{attention_gate.1} parent=47 // pred_check
          %p321 = pneg %p92
        $region58: #{attention_gate.1} parent=47 // pred_check_branch
          %323 = sbr.rel (%p321) target = $region60
        $region59: #{attention_gate.1} parent=47 // pred_region
          %324 = dma.done [#allocation6], 16
        $region60: #{attention_gate.1} parent=47 // pred_fallthru
          _
        // Predicated region
        $region61: #{attention_gate.1} parent=47 // pred_check
          %p325 = pneg %p113
        $region62: #{attention_gate.1} parent=47 // pred_check_branch
          %327 = sbr.rel (%p325) target = $region64
        $region63: #{attention_gate.1} parent=47 // pred_region
          %328 = dma.done [#allocation9], 16
        $region64: #{attention_gate.1} parent=47 // pred_fallthru
          _
        %329 = sfence
        %p330 = pneg %p50
        %p331 = pneg %p47
        %p332 = pneg %p71
        %p333 = pneg %p68
        %p334 = pneg %p92
        %p335 = pneg %p89
        %p336 = pneg %p113
        %p337 = pneg %p110
        %p338 = pneg %p134
        %p339 = pneg %p131
        %p340 = scmp.lt.s32.totalorder %s26, 1
        %s341 = scalar_select %p340, %s26, 1
        %p342 = scmp.lt.s32.totalorder %s27, 0
        %s343 = scalar_select %p342, %s27, 0
        %s344 = smul.addr %s341, 4
        %s345 = sadd.s32 %s343, %s344
        %s346 = smul.addr %s345, 2
        %s347 = scalar_lea.vmem %s5, %s346
        %p348 = pneg %p162
        %p349 = pneg %p159
        %p350 = scmp.lt.s32.totalorder %s26, 1
        %s351 = scalar_select %p350, %s26, 1
        %p352 = scmp.lt.s32.totalorder %s27, 0
        %s353 = scalar_select %p352, %s27, 0
        %s354 = smul.addr %s351, 4
        %s355 = sadd.s32 %s353, %s354
        %s356 = smul.addr %s355, 2
        %s357 = scalar_lea.vmem %s6, %s356
        %p358 = pneg %p190
        %p359 = pneg %p187
        %p360 = pneg %p218
        %p361 = pneg %p215
        %p362 = scmp.lt.s32.totalorder %s26, 1
        %s363 = scalar_select %p362, %s26, 1
        %p364 = scmp.lt.s32.totalorder %s27, 0
        %s365 = scalar_select %p364, %s27, 0
        %s366 = smul.addr %s363, 4
        %s367 = sadd.s32 %s365, %s366
        %s368 = smul.addr %s367, 2
        %s369 = scalar_lea.vmem %s7, %s368
        %p370 = scmp.lt.s32.totalorder %s26, 1
        %s371 = scalar_select %p370, %s26, 1
        %p372 = scmp.lt.s32.totalorder %s27, 0
        %s373 = scalar_select %p372, %s27, 0
        %s374 = smul.addr %s371, 4
        %s375 = sadd.s32 %s373, %s374
        %s376 = smul.addr %s375, 2
        %s377 = scalar_lea.vmem %s5, %s376
        %p378 = scmp.lt.s32.totalorder %s26, 1
        %s379 = scalar_select %p378, %s26, 1
        %p380 = scmp.lt.s32.totalorder %s27, 0
        %s381 = scalar_select %p380, %s27, 0
        %s382 = smul.addr %s379, 4
        %s383 = sadd.s32 %s381, %s382
        %s384 = smul.addr %s383, 2
        %s385 = scalar_lea.vmem %s6, %s384
        %p386 = scmp.lt.s32.totalorder %s26, 1
        %s387 = scalar_select %p386, %s26, 1
        %p388 = scmp.lt.s32.totalorder %s27, 0
        %s389 = scalar_select %p388, %s27, 0
        %s390 = smul.addr %s387, 4
        %s391 = sadd.s32 %s389, %s390
        %s392 = smul.addr %s391, 2
        %s393 = scalar_lea.vmem %s7, %s392
        %v394 = vld [vmem:[%s377] sm:$0x3]
        %v395 = vld [vmem:[%s377 + $0x2] sm:$0x3]
        %v396 = vld [vmem:[%s377 + $0x4] sm:$0x3]
        %v397 = vld [vmem:[%s377 + $0x6] sm:$0x3]
        %v398 = vld [vmem:[%s385] sm:$0x3]
        %v399 = vld [vmem:[%s385 + $0x2] sm:$0x3]
        %v400 = vld [vmem:[%s385 + $0x4] sm:$0x3]
        %v401 = vld [vmem:[%s385 + $0x6] sm:$0x3]
        %s402 = sld [smem:[#allocation2]]
        %v403 = vstv %s402
        %s404 = sld [smem:[#allocation7]]
        %v405 = vstv %s404
        %s406 = sld [smem:[#allocation3]]
        %v407 = vstv %s406
        %v408 = vmul.f32 %v407, %v394
        %v409 = vadd.f32 %v405, %v408
        %s410 = sld [smem:[#allocation3 + $0x80]]
        %v411 = vstv %s410
        %v412 = vmul.f32 %v411, %v395
        %v413 = vadd.f32 %v409, %v412
        %s414 = sld [smem:[#allocation3 + $0x100]]
        %v415 = vstv %s414
        %v416 = vmul.f32 %v415, %v396
        %v417 = vadd.f32 %v413, %v416
        %s418 = sld [smem:[#allocation3 + $0x180]]
        %v419 = vstv %s418
        %v420 = vmul.f32 %v419, %v397
        %v421 = vadd.f32 %v417, %v420
        %s422 = sld [smem:[#allocation5]]
        %v423 = vstv %s422
        %v424 = vmul.f32 %v423, %v398
        %v425 = vadd.f32 %v421, %v424
        %s426 = sld [smem:[#allocation5 + $0x80]]
        %v427 = vstv %s426
        %v428 = vmul.f32 %v427, %v399
        %v429 = vadd.f32 %v425, %v428
        %s430 = sld [smem:[#allocation5 + $0x100]]
        %v431 = vstv %s430
        %v432 = vmul.f32 %v431, %v400
        %v433 = vadd.f32 %v429, %v432
        %s434 = sld [smem:[#allocation5 + $0x180]]
        %v435 = vstv %s434
        %v436 = vmul.f32 %v435, %v401
        %v437 = vadd.f32 %v433, %v436
        %s438 = sld [smem:[#allocation8]]
        %v439 = vmax.f32 %v437, 0.0
        %v440 = vstv %s438
        %v441 = vmul.f32 %v440, %v439
        %v442 = vadd.f32 %v403, %v441
        %s443 = sld [smem:[#allocation7 + $0x1]]
        %v444 = vstv %s443
        %s445 = sld [smem:[#allocation3 + $0x1]]
        %v446 = vstv %s445
        %v447 = vmul.f32 %v446, %v394
        %v448 = vadd.f32 %v444, %v447
        %s449 = sld [smem:[#allocation3 + $0x81]]
        %v450 = vstv %s449
        %v451 = vmul.f32 %v450, %v395
        %v452 = vadd.f32 %v448, %v451
        %s453 = sld [smem:[#allocation3 + $0x101]]
        %v454 = vstv %s453
        %v455 = vmul.f32 %v454, %v396
        %v456 = vadd.f32 %v452, %v455
        %s457 = sld [smem:[#allocation3 + $0x181]]
        %v458 = vstv %s457
        %v459 = vmul.f32 %v458, %v397
        %v460 = vadd.f32 %v456, %v459
        %s461 = sld [smem:[#allocation5 + $0x1]]
        %v462 = vstv %s461
        %v463 = vmul.f32 %v462, %v398
        %v464 = vadd.f32 %v460, %v463
        %s465 = sld [smem:[#allocation5 + $0x81]]
        %v466 = vstv %s465
        %v467 = vmul.f32 %v466, %v399
        %v468 = vadd.f32 %v464, %v467
        %s469 = sld [smem:[#allocation5 + $0x101]]
        %v470 = vstv %s469
        %v471 = vmul.f32 %v470, %v400
        %v472 = vadd.f32 %v468, %v471
        %s473 = sld [smem:[#allocation5 + $0x181]]
        %v474 = vstv %s473
        %v475 = vmul.f32 %v474, %v401
        %v476 = vadd.f32 %v472, %v475
        %s477 = sld [smem:[#allocation8 + $0x1]]
        %v478 = vmax.f32 %v476, 0.0
        %v479 = vstv %s477
        %v480 = vmul.f32 %v479, %v478
        %v481 = vadd.f32 %v442, %v480
        %v482 = vxor.u32 %v481, 2147483648
        %v483 = vmul.f32 %v482, 1.442695
        %v484 = vpow.pop %v483
        %v485 = vadd.f32 %v484, 1.0
        %v486 = vrcp.pop %v485
        %v487 = vmul.f32 1.0, %v486
        %v488 = vmul.f32 %v398, %v487
        %v489 = vmul.f32 %v399, %v487
        %v490 = vmul.f32 %v400, %v487
        %v491 = vmul.f32 %v401, %v487
        %492 = vst [vmem:[%s393] sm:$0x3] %v488
        %493 = vst [vmem:[%s393 + $0x2] sm:$0x3] %v489
        %494 = vst [vmem:[%s393 + $0x4] sm:$0x3] %v490
        %495 = vst [vmem:[%s393 + $0x6] sm:$0x3] %v491
        %p496 = scmp.lt.s32.totalorder %s26, 1
        %s497 = scalar_select %p496, %s26, 1
        %p498 = scmp.lt.s32.totalorder %s27, 0
        %s499 = scalar_select %p498, %s27, 0
        %s500 = smul.addr %s497, 4
        %s501 = sadd.s32 %s499, %s500
        %s502 = smul.addr %s501, 2
        %s503 = scalar_lea.vmem %s7, %s502
        // Predicated region
        $region65: #{attention_gate.1} parent=47 // pred_check
          %p504 = pneg %p215
        $region66: #{attention_gate.1} parent=47 // pred_check_branch
          %506 = sbr.rel (%p504) target = $region68
        $region67: #{attention_gate.1} parent=47 // pred_region
          _
        $region68: #{attention_gate.1} parent=47 // pred_fallthru
          _
      $region48: #{attention_gate.1} parent=5 // pred_fallthru
        _
      %p507 = scmp.le.s32.totalorder 2, %s17
      // Predicated region
      $region69: #{attention_gate.1} parent=5 // pred_check
        %p508 = pneg %p507
      $region70: #{attention_gate.1} parent=5 // pred_check_branch
        %510 = sbr.rel (%p508) target = $region72
      $region71: #{attention_gate.1} parent=5 // pred_region
        %s511 = ssub.s32 %s17, 2
        // Predicated region
        $region73: #{attention_gate.1} parent=71 // pred_check
          %p512 = pneg %p221
        $region74: #{attention_gate.1} parent=71 // pred_check_branch
          %514 = sbr.rel (%p512) target = $region76
        $region75: #{attention_gate.1} parent=71 // pred_region
          %p515 = scmp.lt.s32.totalorder %s28, 1
          %s516 = scalar_select %p515, %s28, 1
          %p517 = scmp.lt.s32.totalorder %s29, 0
          %s518 = scalar_select %p517, %s29, 0
          %s519 = smul.addr %s516, 4
          %s520 = sadd.s32 %s518, %s519
          %s521 = smul.addr %s520, 2
          %s522 = scalar_lea.vmem %s7, %s521
        $region76: #{attention_gate.1} parent=71 // pred_fallthru
          _
      $region72: #{attention_gate.1} parent=5 // pred_fallthru
        _
    $region6: #{attention_gate.1} parent=1 // loop_footer
      %s21 = sadd.s32 1, %s17
    $region7: #{attention_gate.1} parent=1 // loop_footer_branch
      %16 = sbr.rel target = $region3
    $region8: #{attention_gate.1} parent=1 // loop_exit
      _
    %523 = vsyncpa [#allocation4], 1
    %s524 = scalar_lea.sflag [#allocation4], 1
    %525 = vsyncpa %s524, 1
    %526 = vsyncpa [#allocation6], 1
    %527 = vsyncpa [#allocation9], 1

</llo_original>
